<compile_context>
chip_gen: v6e
topology: v6e:2x2x1
jax: 0.10.0
libtpu: 0.0.40
codegen_flags: <defaults>
</compile_context>

<pallas_src>
import jax
import jax.numpy as jnp
from jax import lax
from jax.experimental import pallas as pl
from jax.experimental.pallas import tpu as pltpu


def _tpu_vmem_bytes():
    try:
        return int(pltpu.get_tpu_info().vmem_capacity_bytes)
    except Exception:
        return 64 << 20          # conservative fallback (v7x-sized)


def _num_tensorcores():
    try:
        kind = jax.devices()[0].device_kind.lower()
    except Exception:
        return 1
    return 2 if ("v7" in kind or "7x" in kind) else 1


def _largest_divisor_leq(n, cap):
    cap = max(1, min(n, cap))
    for d in range(cap, 0, -1):
        if n % d == 0:
            return d
    return 1


def channel_attention(x, w1, w2, *, target_tile_bytes=4 << 20, max_images_per_block=8):
    """CBAM ChannelAttention forward.

    x : [B, C, H, W]      (NCHW, same as PyTorch)
    w1: [C // ratio, C]   squeezed Conv2d(C, C//ratio, 1, bias=False) weight
    w2: [C, C // ratio]   squeezed Conv2d(C//ratio, C, 1, bias=False) weight
    """
    B, C, H, W = x.shape
    Cr = w1.shape[0]
    assert w1.shape == (Cr, C) and w2.shape == (C, Cr)

    HW = H * W
    HWp = -(-HW // 128) * 128                      # pad HW up to a lane multiple
    needs_mask = HWp != HW
    itemsize = jnp.dtype(x.dtype).itemsize

    # ---- HW chunking: largest 128-multiple divisor of HWp whose f32 working
    #      set stays <= ~64 KiB (half the vreg file) ---------------------------
    cap_elems = max(128, ((64 * 1024) // (C * 4)) // 128 * 128)
    chunk = 128
    for d in range(128, HWp + 1, 128):
        if HWp % d == 0 and d <= cap_elems:
            chunk = d
    n_chunks = HWp // chunk
    n_sub = chunk // 128
    use_static = n_chunks <= 16                    # small: static unroll; big: fori_loop

    # ---- batch blocking --------------------------------------------------------
    hw_vmem = _tpu_vmem_bytes()
    n_tc = _num_tensorcores()
    per_image = C * HWp * itemsize

    cap_tile = max(1, target_tile_bytes // per_image)
    cap_vmem = max(1, (hw_vmem - (16 << 20)) // (4 * per_image))   # in+out, double buffered
    min_steps = 2 * n_tc if n_tc > 1 else 1        # >=2 steps per TC on v7x; no halving on 1-TC parts
    steps_target = max(1, min(min_steps, B))
    cap_steps = max(1, B // steps_target)
    cap = max(1, min(cap_tile, cap_vmem, max_images_per_block, cap_steps, B))
    bB = _largest_divisor_leq(B, cap)              # always divides B: no batch padding
    # TODO(synk): when a single (C, HWp) image slab no longer fits double-buffered in
    # VMEM (huge C*H*W on v7x's 64 MiB), switch to a two-phase HW-tiled schedule
    # (pooling pass with resident per-channel accumulators + gating pass).

    # ---- pad / flatten input; hoist weight casts out of the kernel -------------
    x_flat = x.reshape(B, C, HW)
    if needs_mask:
        # TODO(synk): a masked in-kernel tail store on an unpadded block would avoid
        # this extra HBM pad/slice round trip for ragged HW.
        x_flat = jnp.pad(x_flat, ((0, 0), (0, 0), (0, HWp - HW)))
    w1f = w1.astype(jnp.float32)
    w2f = w2.astype(jnp.float32)
    inv_hw = 1.0 / float(HW)

    def kernel(x_ref, w1_ref, w2_ref, o_ref):
        f32 = jnp.float32
        w1v = w1_ref[...]                          # (Cr, C)  f32
        w2v = w2_ref[...]                          # (C, Cr)  f32

        def pool_chunk_static(blk, sacc, macc, off):
            # blk: (C, chunk) f32; off: static python int global offset
            for j in range(n_sub):
                start = off + j * 128
                if needs_mask and start >= HW:
                    break                          # fully inside the zero padding
                sub = blk[:, j * 128:(j + 1) * 128]
                sacc = sacc + sub                  # zero padding is harmless for the sum
                if needs_mask and start + 128 > HW:
                    lane = lax.broadcasted_iota(jnp.int32, (C, 128), 1)
                    sub = jnp.where(lane + start < HW, sub, -jnp.inf)
                macc = jnp.maximum(macc, sub)
            return sacc, macc

        # -------- pass 1: pooling with lane-parallel VPU accumulators ----------
        avg_cols, max_cols = [], []
        for b in range(bB):                        # bB <= 8: bounded static unroll
            sacc = jnp.zeros((C, 128), f32)
            macc = jnp.full((C, 128), -jnp.inf, f32)
            if use_static:
                for ci in range(n_chunks):
                    off = ci * chunk
                    blk = x_ref[b, :, off:off + chunk].astype(f32)
                    sacc, macc = pool_chunk_static(blk, sacc, macc, off)
            else:
                n_full = n_chunks - 1 if needs_mask else n_chunks

                def body(ci, carry, _b=b):
                    sa, ma = carry
                    off = pl.multiple_of(ci * chunk, 128)
                    blk = x_ref[_b, :, pl.ds(off, chunk)].astype(f32)
                    for j in range(n_sub):
                        sub = blk[:, j * 128:(j + 1) * 128]
                        sa = sa + sub
                        ma = jnp.maximum(ma, sub)
                    return sa, ma

                sacc, macc = lax.fori_loop(0, n_full, body, (sacc, macc),
                                           unroll=min(4, n_full))
                if needs_mask:                     # only the tail chunk needs a mask
                    off = (n_chunks - 1) * chunk
                    blk = x_ref[b, :, off:off + chunk].astype(f32)
                    sacc, macc = pool_chunk_static(blk, sacc, macc, off)

            avg_cols.append(jnp.sum(sacc, axis=1, keepdims=True) * inv_hw)   # (C, 1)
            max_cols.append(jnp.max(macc, axis=1, keepdims=True))            # (C, 1)

        # -------- shared MLP, batched across all bB images (one dot pair) ------
        col = lax.broadcasted_iota(jnp.int32, (C, 2 * bB), 1)
        rhs = jnp.zeros((C, 2 * bB), f32)
        for b in range(bB):                        # columns [0:bB)=avg, [bB:2bB)=max
            rhs = jnp.where(col == b, avg_cols[b], rhs)
            rhs = jnp.where(col == bB + b, max_cols[b], rhs)
        h = jnp.maximum(jnp.dot(w1v, rhs, preferred_element_type=f32), 0.0)   # (Cr, 2bB)
        o2 = jnp.dot(w2v, h, preferred_element_type=f32)                      # (C, 2bB)
        logits = o2[:, :bB] + o2[:, bB:]                                      # (C, bB)
        scale_all = jax.nn.sigmoid(logits)                                    # (C, bB) f32

        # -------- pass 2: streaming gate multiply (f32 math, cast at store) ----
        for b in range(bB):
            scale_wide = jnp.broadcast_to(scale_all[:, b:b + 1], (C, chunk))  # hoisted
            if use_static:
                for ci in range(n_chunks):
                    off = ci * chunk
                    blk = x_ref[b, :, off:off + chunk]
                    o_ref[b, :, off:off + chunk] = (
                        blk.astype(f32) * scale_wide).astype(o_ref.dtype)
            else:
                def apply_body(ci, carry, _b=b, _sw=scale_wide):
                    off = pl.multiple_of(ci * chunk, 128)
                    blk = x_ref[_b, :, pl.ds(off, chunk)]
                    o_ref[_b, :, pl.ds(off, chunk)] = (
                        blk.astype(f32) * _sw).astype(o_ref.dtype)
                    return carry

                lax.fori_loop(0, n_chunks, apply_body, 0, unroll=min(4, n_chunks))

    # ---- VMEM budget: clamp to actual hardware capacity minus headroom ---------
    tile_bytes = bB * per_image
    w_bytes = (w1.size + w2.size) * 4
    vmem_need = 4 * tile_bytes + 4 * w_bytes + (2 << 20)
    vmem_limit = int(max(32 << 20, vmem_need))
    vmem_limit = int(min(vmem_limit, max(16 << 20, hw_vmem - (4 << 20))))

    out_flat = pl.pallas_call(
        kernel,
        out_shape=jax.ShapeDtypeStruct((B, C, HWp), x.dtype),
        grid_spec=pltpu.PrefetchScalarGridSpec(
            num_scalar_prefetch=0,
            grid=(B // bB,),
            in_specs=[
                pl.BlockSpec((bB, C, HWp), lambda i: (i, 0, 0)),
                pl.BlockSpec((Cr, C), lambda i: (0, 0)),
                pl.BlockSpec((C, Cr), lambda i: (0, 0)),
            ],
            out_specs=pl.BlockSpec((bB, C, HWp), lambda i: (i, 0, 0)),
        ),
        compiler_params=pltpu.CompilerParams(
            dimension_semantics=("parallel",),
            vmem_limit_bytes=vmem_limit,
        ),
    )(x_flat, w1f, w2f)

    if needs_mask:
        out_flat = out_flat[:, :, :HW]
    return out_flat.reshape(B, C, H, W)


def channel_attention_ref(x, w1, w2):
    # pure-JAX reference (f32, highest-precision dots) for sanity checking
    xf = x.astype(jnp.float32)
    avg = jnp.mean(xf, axis=(2, 3))                # (B, C)
    mx = jnp.max(xf, axis=(2, 3))                  # (B, C)
    hp = jax.lax.Precision.HIGHEST
    w1f = w1.astype(jnp.float32)
    w2f = w2.astype(jnp.float32)

    def fc(v):
        h = jnp.maximum(jnp.dot(v, w1f.T, precision=hp), 0.0)   # (B, Cr)
        return jnp.dot(h, w2f.T, precision=hp)                  # (B, C)

    scale = jax.nn.sigmoid(fc(avg) + fc(mx))[:, :, None, None]
    return (xf * scale).astype(x.dtype)


if __name__ == "__main__":
    key = jax.random.PRNGKey(0)

    def run_case(k, B, C, H, W, ratio=8):
        kx, k1, k2 = jax.random.split(k, 3)
        Cr = max(1, C // ratio)
        x = jax.random.normal(kx, (B, C, H, W), dtype=jnp.float32)
        w1 = jax.random.normal(k1, (Cr, C), dtype=jnp.float32) * 0.1
        w2 = jax.random.normal(k2, (C, Cr), dtype=jnp.float32) * 0.1
        y = jax.block_until_ready(channel_attention(x, w1, w2))
        y_ref = channel_attention_ref(x, w1, w2)
        assert y.shape == x.shape
        assert jnp.allclose(y, y_ref, atol=2e-5, rtol=2e-5), f"mismatch at {(B, C, H, W)}"

    k0, k1, k2 = jax.random.split(key, 3)
    run_case(k0, 2, 16, 16, 16)   # HW = 256, lane aligned, batched MLP over 1-2 images
    run_case(k1, 2, 32, 10, 10)   # HW = 100 -> padded to 128 (masked-max tail path)
    run_case(k2, 3, 16, 24, 24)   # HW = 576 -> padded to 640, multi-sub-slice chunk
    print("KERNEL_OK")
</pallas_src>

<mosaic_0001>
module attributes {stable_mosaic.version = 11 : i64} {
  func.func @kernel(%arg0: i32, %arg1: memref<2x16x256xf32, #tpu.memory_space<vmem>>, %arg2: memref<2x16xf32, #tpu.memory_space<vmem>>, %arg3: memref<16x2xf32, #tpu.memory_space<vmem>>, %arg4: memref<2x16x256xf32, #tpu.memory_space<vmem>>) attributes {dimension_semantics = [#tpu.dimension_semantics<parallel>], iteration_bounds = array<i64: 1>, scalar_prefetch = 0 : i64, scratch_operands = 0 : i64, tpu.core_type = #tpu.core_type<tc>, window_params = [{transform_indices = @transform_0, window_bounds = array<i64: 2, 16, 256>}, {pipeline_mode = #tpu.pipeline_mode<synchronous>, transform_indices = @transform_1, window_bounds = array<i64: 2, 16>}, {pipeline_mode = #tpu.pipeline_mode<synchronous>, transform_indices = @transform_2, window_bounds = array<i64: 16, 2>}, {transform_indices = @transform_3, window_bounds = array<i64: 2, 16, 256>}]} {
    %c0 = arith.constant 0 : index
    %c0_0 = arith.constant 0 : index
    %0 = vector.load %arg2[%c0, %c0_0] : memref<2x16xf32, #tpu.memory_space<vmem>>, vector<2x16xf32>
    %c0_1 = arith.constant 0 : index
    %c0_2 = arith.constant 0 : index
    %1 = vector.load %arg3[%c0_1, %c0_2] : memref<16x2xf32, #tpu.memory_space<vmem>>, vector<16x2xf32>
    %cst = arith.constant 0.000000e+00 : f32
    %2 = vector.broadcast %cst : f32 to vector<16x128xf32>
    %cst_3 = arith.constant 0xFF800000 : f32
    %3 = vector.broadcast %cst_3 : f32 to vector<16x128xf32>
    %c0_4 = arith.constant 0 : index
    %c0_5 = arith.constant 0 : index
    %c0_6 = arith.constant 0 : index
    %4 = vector.load %arg1[%c0_4, %c0_5, %c0_6] : memref<2x16x256xf32, #tpu.memory_space<vmem>>, vector<1x16x256xf32>
    %5 = vector.shape_cast %4 : vector<1x16x256xf32> to vector<16x256xf32>
    %6 = vector.extract_strided_slice %5 {offsets = [0, 0], sizes = [16, 128], strides = [1, 1]} : vector<16x256xf32> to vector<16x128xf32>
    %7 = arith.addf %2, %6 : vector<16x128xf32>
    %8 = arith.maximumf %3, %6 : vector<16x128xf32>
    %9 = vector.extract_strided_slice %5 {offsets = [0, 128], sizes = [16, 128], strides = [1, 1]} : vector<16x256xf32> to vector<16x128xf32>
    %10 = arith.addf %7, %9 : vector<16x128xf32>
    %11 = arith.maximumf %8, %9 : vector<16x128xf32>
    %cst_7 = arith.constant dense<0.000000e+00> : vector<16xf32>
    %12 = vector.multi_reduction <add>, %10, %cst_7 [1] : vector<16x128xf32> to vector<16xf32>
    %13 = vector.shape_cast %12 : vector<16xf32> to vector<16x1xf32>
    %cst_8 = arith.constant 3.906250e-03 : f32
    %14 = vector.broadcast %cst_8 : f32 to vector<16x1xf32>
    %15 = arith.mulf %13, %14 : vector<16x1xf32>
    %cst_9 = arith.constant dense<0xFF800000> : vector<16xf32>
    %16 = vector.multi_reduction <maximumf>, %11, %cst_9 [1] : vector<16x128xf32> to vector<16xf32>
    %17 = vector.shape_cast %16 : vector<16xf32> to vector<16x1xf32>
    %cst_10 = arith.constant 0.000000e+00 : f32
    %18 = vector.broadcast %cst_10 : f32 to vector<16x128xf32>
    %cst_11 = arith.constant 0xFF800000 : f32
    %19 = vector.broadcast %cst_11 : f32 to vector<16x128xf32>
    %c1 = arith.constant 1 : index
    %c0_12 = arith.constant 0 : index
    %c0_13 = arith.constant 0 : index
    %20 = vector.load %arg1[%c1, %c0_12, %c0_13] : memref<2x16x256xf32, #tpu.memory_space<vmem>>, vector<1x16x256xf32>
    %21 = vector.shape_cast %20 : vector<1x16x256xf32> to vector<16x256xf32>
    %22 = vector.extract_strided_slice %21 {offsets = [0, 0], sizes = [16, 128], strides = [1, 1]} : vector<16x256xf32> to vector<16x128xf32>
    %23 = arith.addf %18, %22 : vector<16x128xf32>
    %24 = arith.maximumf %19, %22 : vector<16x128xf32>
    %25 = vector.extract_strided_slice %21 {offsets = [0, 128], sizes = [16, 128], strides = [1, 1]} : vector<16x256xf32> to vector<16x128xf32>
    %26 = arith.addf %23, %25 : vector<16x128xf32>
    %27 = arith.maximumf %24, %25 : vector<16x128xf32>
    %cst_14 = arith.constant dense<0.000000e+00> : vector<16xf32>
    %28 = vector.multi_reduction <add>, %26, %cst_14 [1] : vector<16x128xf32> to vector<16xf32>
    %29 = vector.shape_cast %28 : vector<16xf32> to vector<16x1xf32>
    %cst_15 = arith.constant 3.906250e-03 : f32
    %30 = vector.broadcast %cst_15 : f32 to vector<16x1xf32>
    %31 = arith.mulf %29, %30 : vector<16x1xf32>
    %cst_16 = arith.constant dense<0xFF800000> : vector<16xf32>
    %32 = vector.multi_reduction <maximumf>, %27, %cst_16 [1] : vector<16x128xf32> to vector<16xf32>
    %33 = vector.shape_cast %32 : vector<16xf32> to vector<16x1xf32>
    %34 = tpu.iota {dimensions = array<i32: 1>} : vector<16x4xi32>
    %cst_17 = arith.constant 0.000000e+00 : f32
    %35 = vector.broadcast %cst_17 : f32 to vector<16x4xf32>
    %c0_i32 = arith.constant 0 : i32
    %36 = vector.broadcast %c0_i32 : i32 to vector<16x4xi32>
    %37 = arith.cmpi eq, %34, %36 : vector<16x4xi32>
    %38 = vector.shape_cast %15 : vector<16x1xf32> to vector<16x1xf32>
    %39 = vector.broadcast %38 : vector<16x1xf32> to vector<16x4xf32>
    %40 = arith.select %37, %39, %35 : vector<16x4xi1>, vector<16x4xf32>
    %c2_i32 = arith.constant 2 : i32
    %41 = vector.broadcast %c2_i32 : i32 to vector<16x4xi32>
    %42 = arith.cmpi eq, %34, %41 : vector<16x4xi32>
    %43 = vector.shape_cast %17 : vector<16x1xf32> to vector<16x1xf32>
    %44 = vector.broadcast %43 : vector<16x1xf32> to vector<16x4xf32>
    %45 = arith.select %42, %44, %40 : vector<16x4xi1>, vector<16x4xf32>
    %c1_i32 = arith.constant 1 : i32
    %46 = vector.broadcast %c1_i32 : i32 to vector<16x4xi32>
    %47 = arith.cmpi eq, %34, %46 : vector<16x4xi32>
    %48 = vector.shape_cast %31 : vector<16x1xf32> to vector<16x1xf32>
    %49 = vector.broadcast %48 : vector<16x1xf32> to vector<16x4xf32>
    %50 = arith.select %47, %49, %45 : vector<16x4xi1>, vector<16x4xf32>
    %c3_i32 = arith.constant 3 : i32
    %51 = vector.broadcast %c3_i32 : i32 to vector<16x4xi32>
    %52 = arith.cmpi eq, %34, %51 : vector<16x4xi32>
    %53 = vector.shape_cast %33 : vector<16x1xf32> to vector<16x1xf32>
    %54 = vector.broadcast %53 : vector<16x1xf32> to vector<16x4xf32>
    %55 = arith.select %52, %54, %50 : vector<16x4xi1>, vector<16x4xf32>
    %cst_18 = arith.constant dense<0.000000e+00> : vector<2x4xf32>
    %56 = tpu.matmul %0, %55, %cst_18 {dimension_numbers = #tpu.dot_dimension_numbers<[1], [0], [0], [1], [0, 0, 1, 1], [], []>} : vector<2x16xf32>, vector<16x4xf32>, vector<2x4xf32> -> vector<2x4xf32>
    %cst_19 = arith.constant 0.000000e+00 : f32
    %57 = vector.broadcast %cst_19 : f32 to vector<2x4xf32>
    %58 = arith.maximumf %56, %57 : vector<2x4xf32>
    %cst_20 = arith.constant dense<0.000000e+00> : vector<16x4xf32>
    %59 = tpu.matmul %1, %58, %cst_20 {dimension_numbers = #tpu.dot_dimension_numbers<[1], [0], [0], [1], [0, 0, 1, 1], [], []>} : vector<16x2xf32>, vector<2x4xf32>, vector<16x4xf32> -> vector<16x4xf32>
    %60 = vector.extract_strided_slice %59 {offsets = [0, 0], sizes = [16, 2], strides = [1, 1]} : vector<16x4xf32> to vector<16x2xf32>
    %61 = vector.extract_strided_slice %59 {offsets = [0, 2], sizes = [16, 2], strides = [1, 1]} : vector<16x4xf32> to vector<16x2xf32>
    %62 = arith.addf %60, %61 : vector<16x2xf32>
    %63 = arith.negf %62 : vector<16x2xf32>
    %64 = math.exp %63 : vector<16x2xf32>
    %cst_21 = arith.constant 1.000000e+00 : f32
    %65 = vector.broadcast %cst_21 : f32 to vector<16x2xf32>
    %66 = arith.addf %65, %64 : vector<16x2xf32>
    %67 = arith.divf %65, %66 : vector<16x2xf32>
    %68 = vector.extract_strided_slice %67 {offsets = [0, 0], sizes = [16, 1], strides = [1, 1]} : vector<16x2xf32> to vector<16x1xf32>
    %69 = vector.shape_cast %68 : vector<16x1xf32> to vector<16x1xf32>
    %70 = vector.broadcast %69 : vector<16x1xf32> to vector<16x256xf32>
    %c0_22 = arith.constant 0 : index
    %c0_23 = arith.constant 0 : index
    %c0_24 = arith.constant 0 : index
    %71 = vector.load %arg1[%c0_22, %c0_23, %c0_24] : memref<2x16x256xf32, #tpu.memory_space<vmem>>, vector<1x16x256xf32>
    %72 = vector.shape_cast %71 : vector<1x16x256xf32> to vector<16x256xf32>
    %73 = arith.mulf %72, %70 : vector<16x256xf32>
    %c0_25 = arith.constant 0 : index
    %c0_26 = arith.constant 0 : index
    %c0_27 = arith.constant 0 : index
    %74 = vector.load %arg4[%c0_25, %c0_26, %c0_27] : memref<2x16x256xf32, #tpu.memory_space<vmem>>, vector<1x16x256xf32>
    %75 = vector.shape_cast %74 : vector<1x16x256xf32> to vector<16x256xf32>
    %76 = vector.shape_cast %73 : vector<16x256xf32> to vector<1x16x256xf32>
    tpu.vector_store %arg4[%c0_25, %c0_26, %c0_27], %76 {strides = array<i32>} : memref<2x16x256xf32, #tpu.memory_space<vmem>>, vector<1x16x256xf32>,
    %77 = vector.extract_strided_slice %67 {offsets = [0, 1], sizes = [16, 1], strides = [1, 1]} : vector<16x2xf32> to vector<16x1xf32>
    %78 = vector.shape_cast %77 : vector<16x1xf32> to vector<16x1xf32>
    %79 = vector.broadcast %78 : vector<16x1xf32> to vector<16x256xf32>
    %c1_28 = arith.constant 1 : index
    %c0_29 = arith.constant 0 : index
    %c0_30 = arith.constant 0 : index
    %80 = vector.load %arg1[%c1_28, %c0_29, %c0_30] : memref<2x16x256xf32, #tpu.memory_space<vmem>>, vector<1x16x256xf32>
    %81 = vector.shape_cast %80 : vector<1x16x256xf32> to vector<16x256xf32>
    %82 = arith.mulf %81, %79 : vector<16x256xf32>
    %c1_31 = arith.constant 1 : index
    %c0_32 = arith.constant 0 : index
    %c0_33 = arith.constant 0 : index
    %83 = vector.load %arg4[%c1_31, %c0_32, %c0_33] : memref<2x16x256xf32, #tpu.memory_space<vmem>>, vector<1x16x256xf32>
    %84 = vector.shape_cast %83 : vector<1x16x256xf32> to vector<16x256xf32>
    %85 = vector.shape_cast %82 : vector<16x256xf32> to vector<1x16x256xf32>
    tpu.vector_store %arg4[%c1_31, %c0_32, %c0_33], %85 {strides = array<i32>} : memref<2x16x256xf32, #tpu.memory_space<vmem>>, vector<1x16x256xf32>,
    return
  }
  func.func @transform_0(%arg0: i32) -> (i32, i32, i32) {
    %c0_i32 = arith.constant 0 : i32
    %c0_i32_0 = arith.constant 0 : i32
    %c0_i32_1 = arith.constant 0 : i32
    return %arg0, %c0_i32, %c0_i32_0 : i32, i32, i32
  }
  func.func @transform_1(%arg0: i32) -> (i32, i32) {
    %c0_i32 = arith.constant 0 : i32
    %c0_i32_0 = arith.constant 0 : i32
    %c0_i32_1 = arith.constant 0 : i32
    return %c0_i32, %c0_i32_0 : i32, i32
  }
  func.func @transform_2(%arg0: i32) -> (i32, i32) {
    %c0_i32 = arith.constant 0 : i32
    %c0_i32_0 = arith.constant 0 : i32
    %c0_i32_1 = arith.constant 0 : i32
    return %c0_i32, %c0_i32_0 : i32, i32
  }
  func.func @transform_3(%arg0: i32) -> (i32, i32, i32) {
    %c0_i32 = arith.constant 0 : i32
    %c0_i32_0 = arith.constant 0 : i32
    %c0_i32_1 = arith.constant 0 : i32
    return %arg0, %c0_i32, %c0_i32_0 : i32, i32, i32
  }
}

</mosaic_0001>

<llo_original>
// kernel: tpu_custom_call.1
$region0: #{tpu_custom_call.1}
  #allocation0 [shape = 'u32[]', space=smem, size = 0x4, offset = 0x4, fixed_abs, tag = 'smem constant byte address 0x4 - core index']
  #allocation1 [shape = 'u32[144,128]{1,0:T(1,128)}', space=vmem, size = 0x12000, scoped, tag = 'internal scratch']
  %s0 = inlined_call_operand.hbm [shape: f32[2,16,256], index: 0, kind: input, shape index: {}]
  %s1 = inlined_call_operand.vmem [shape: f32[2,16], index: 1, kind: input, shape index: {}]
  %s2 = inlined_call_operand.vmem [shape: f32[16,2], index: 2, kind: input, shape index: {}]
  %s3 = inlined_call_operand.hbm [shape: f32[2,16,256], index: 3, kind: output, shape index: {}]
  %s4 = sld [smem:[#allocation0]]
  $region26: #{tpu_custom_call.1} parent=0
    _
  %s6 = ssub.s32 1, %s4
  %s7 = scalar_select 0, %s6, %s4
  $region1: #{tpu_custom_call.1} parent=0
    #allocation2 [shape = 'u8[32768]{0}', space=vmem, size = 0x8000, scoped, tag = 'input window, operand 0, single buffered']
    #allocation3 [shape = 's32[1]{0}', space=sflag, size = 0x4, scoped, tag = 'scoped memory for tpu_custom_call.1']
    #allocation4 [shape = 's32[1]{0}', space=sflag, size = 0x4, scoped, tag = 'scoped memory for tpu_custom_call.1']
    #allocation5 [shape = 'u8[32768]{0}', space=vmem, size = 0x8000, scoped, tag = 'output window, operand 0, single buffered']
    %8 = vsyncpa [#allocation3], 0
    %9 = vsyncpa [#allocation4], 0
    // Predicated region
    $region2: #{tpu_custom_call.1} parent=1 // pred_check
      _
    $region3: #{tpu_custom_call.1} parent=1 // pred_check_branch
      %11 = sbr.rel (0) target = $region5
    $region4: #{tpu_custom_call.1} parent=1 // pred_region
      %s13 = ssub.s32 1024, 1024
      %14 = vsyncadd [#allocation3], %s13
      %s15 = sshll.u32 [#allocation2], 4
      %s16 = int_to_ptr.vmem [resolvable:$true] %s15
      %21 = dma.hbm_to_vmem [thread:$0]  %s0, 1024, %s16, [#allocation3], 256, 256, 16
    $region5: #{tpu_custom_call.1} parent=1 // pred_fallthru
      _
    // Predicated region
    $region6: #{tpu_custom_call.1} parent=1 // pred_check
      _
    $region7: #{tpu_custom_call.1} parent=1 // pred_check_branch
      %23 = sbr.rel (0) target = $region9
    $region8: #{tpu_custom_call.1} parent=1 // pred_region
      _
    $region9: #{tpu_custom_call.1} parent=1 // pred_fallthru
      _
    // Predicated region
    $region10: #{tpu_custom_call.1} parent=1 // pred_check
      _
    $region11: #{tpu_custom_call.1} parent=1 // pred_check_branch
      %25 = sbr.rel (0) target = $region13
    $region12: #{tpu_custom_call.1} parent=1 // pred_region
      _
    $region13: #{tpu_custom_call.1} parent=1 // pred_fallthru
      _
    // Predicated region
    $region14: #{tpu_custom_call.1} parent=1 // pred_check
      _
    $region15: #{tpu_custom_call.1} parent=1 // pred_check_branch
      %27 = sbr.rel (0) target = $region17
    $region16: #{tpu_custom_call.1} parent=1 // pred_region
      %28 = dma.done [#allocation3], 1024
    $region17: #{tpu_custom_call.1} parent=1 // pred_fallthru
      _
    %v29 = vld [vmem:[%s1] sm:$0x3]
    %v30 = vld [vmem:[%s2] sm:$0xff]
    %v31 = vld [vmem:[%s2 + $0x8] sm:$0xff]
    %v32 = vld [vmem:[#allocation2] sm:$0xff]
    %v33 = vld [vmem:[#allocation2 + $0x8] sm:$0xff]
    %v34 = vld [vmem:[#allocation2 + $0x10] sm:$0xff]
    %v35 = vld [vmem:[#allocation2 + $0x18] sm:$0xff]
    %v36 = vadd.f32 %v32, 0.0
    %v37 = vadd.f32 %v34, 0.0
    %v38 = vadd.f32 %v36, %v33
    %v39 = vadd.f32 %v37, %v35
    %v40 = vmax.f32 %v32, %v33
    %v41 = vmax.f32 %v34, %v35
    %42 = vadd.xlane.f32.xlu0 %v38
    %v43 = vpop.xlane.xlu0 %42
    %44 = vadd.xlane.f32.xlu0 %v39
    %v45 = vpop.xlane.xlu0 %44
    %v46 = vmul.f32 %v43, 0.00390625
    %v47 = vmul.f32 %v45, 0.00390625
    %48 = vmax.xlane.f32.xlu0 %v40
    %v49 = vpop.xlane.xlu0 %48
    %50 = vmax.xlane.f32.xlu0 %v41
    %v51 = vpop.xlane.xlu0 %50
    %s52 = scalar_lea.vmem [#allocation2], 32
    %v53 = vld [vmem:[%s52] sm:$0xff]
    %v54 = vld [vmem:[%s52 + $0x8] sm:$0xff]
    %v55 = vld [vmem:[%s52 + $0x10] sm:$0xff]
    %v56 = vld [vmem:[%s52 + $0x18] sm:$0xff]
    %v57 = vadd.f32 %v53, 0.0
    %v58 = vadd.f32 %v55, 0.0
    %v59 = vadd.f32 %v57, %v54
    %v60 = vadd.f32 %v58, %v56
    %v61 = vmax.f32 %v53, %v54
    %v62 = vmax.f32 %v55, %v56
    %63 = vadd.xlane.f32.xlu0 %v59
    %v64 = vpop.xlane.xlu0 %63
    %65 = vadd.xlane.f32.xlu0 %v60
    %v66 = vpop.xlane.xlu0 %65
    %v67 = vmul.f32 %v64, 0.00390625
    %v68 = vmul.f32 %v66, 0.00390625
    %69 = vmax.xlane.f32.xlu0 %v61
    %v70 = vpop.xlane.xlu0 %69
    %71 = vmax.xlane.f32.xlu0 %v62
    %v72 = vpop.xlane.xlu0 %71
    %v73 = vlaneseq
    %v74 = vand.u32 %v73, 127
    %vm75 = vcmp.eq.s32.totalorder %v74, 0
    %v76 = vsel %vm75, %v46, 0.0
    %v77 = vsel %vm75, %v47, 0.0
    %vm78 = vcmp.eq.s32.totalorder %v74, 2
    %v79 = vsel %vm78, %v49, %v76
    %v80 = vsel %vm78, %v51, %v77
    %vm81 = vcmp.eq.s32.totalorder %v74, 1
    %v82 = vsel %vm81, %v67, %v79
    %v83 = vsel %vm81, %v68, %v80
    %vm84 = vcmp.eq.s32.totalorder %v74, 3
    %v85 = vsel %vm84, %v70, %v82
    %v86 = vsel %vm84, %v72, %v83
    %vm87 = vcmask 130048
    %v89 = vsel %vm87, %v29, 0
    %91 = vmatprep.subr.mxu0 0.0
    %92 = vmatpush1.msra.mxu0 0.0
    %93 = vmatprep.subr.mxu0 0.0
    %94 = vmatpush1.msra.mxu0 0.0
    %95 = vmatprep.subr.mxu0 0.0
    %96 = vmatpush1.msra.mxu0 0.0
    %97 = vmatprep.subr.mxu0 0.0
    %98 = vmatpush1.msra.mxu0 0.0
    %99 = vmatprep.subr.mxu0 0.0
    %100 = vmatpush1.msra.mxu0 0.0
    %101 = vmatprep.subr.mxu0 0.0
    %102 = vmatpush1.msra.mxu0 0.0
    %103 = vmatprep.subr.mxu0 0.0
    %104 = vmatpush1.msra.mxu0 0.0
    %105 = vmatprep.subr.mxu0 0.0
    %106 = vmatpush1.msra.mxu0 0.0
    %107 = vmatprep.subr.mxu0 0.0
    %108 = vmatpush1.msra.mxu0 0.0
    %109 = vmatprep.subr.mxu0 0.0
    %110 = vmatpush1.msra.mxu0 0.0
    %111 = vmatprep.subr.mxu0 0.0
    %112 = vmatpush1.msra.mxu0 0.0
    %113 = vmatprep.subr.mxu0 0.0
    %114 = vmatpush1.msra.mxu0 0.0
    %115 = vmatprep.subr.mxu0 0.0
    %116 = vmatpush1.msra.mxu0 0.0
    %117 = vmatprep.subr.mxu0 0.0
    %118 = vmatpush1.msra.mxu0 0.0
    %119 = vmatprep.subr.mxu0 0.0
    %120 = vmatpush1.msra.mxu0 %v86
    %121 = vmatprep.subr.mxu0 0.0
    %122 = vmatpush1.msra.mxu0 %v85
    %123 = vmatprep.subr.mxu0 0.0
    %124 = vmatpush2.msra.mxu0 0.0
    %125 = vmatprep.subr.mxu0 0.0
    %126 = vmatpush2.msra.mxu0 0.0
    %127 = vmatprep.subr.mxu0 0.0
    %128 = vmatpush2.msra.mxu0 0.0
    %129 = vmatprep.subr.mxu0 0.0
    %130 = vmatpush2.msra.mxu0 0.0
    %131 = vmatprep.subr.mxu0 0.0
    %132 = vmatpush2.msra.mxu0 0.0
    %133 = vmatprep.subr.mxu0 0.0
    %134 = vmatpush2.msra.mxu0 0.0
    %135 = vmatprep.subr.mxu0 0.0
    %136 = vmatpush2.msra.mxu0 0.0
    %137 = vmatprep.subr.mxu0 0.0
    %138 = vmatpush2.msra.mxu0 0.0
    %139 = vmatprep.subr.mxu0 0.0
    %140 = vmatpush2.msra.mxu0 0.0
    %141 = vmatprep.subr.mxu0 0.0
    %142 = vmatpush2.msra.mxu0 0.0
    %143 = vmatprep.subr.mxu0 0.0
    %144 = vmatpush2.msra.mxu0 0.0
    %145 = vmatprep.subr.mxu0 0.0
    %146 = vmatpush2.msra.mxu0 0.0
    %147 = vmatprep.subr.mxu0 0.0
    %148 = vmatpush2.msra.mxu0 0.0
    %149 = vmatprep.subr.mxu0 0.0
    %150 = vmatpush2.msra.mxu0 0.0
    %151 = vmatprep.subr.mxu0 0.0
    %152 = vmatpush2.msra.mxu0 0.0
    %153 = vmatprep.subr.mxu0 0.0
    %154 = vmatpush2.msra.mxu0 0.0
    %155 = vmatprep.mubr.f32.mxu0 0.0
    %156 = vmatmul.mubr.f32.gmra.mxu0 %v89
    %v157 = vpop.f32.mrf.mxu0
    %v158 = vadd.f32 0.0, %v157
    %v159 = vpop.f32.mrf.mxu0
    %160 = vdwg.mxu0
    %v161 = vmax.f32 %v158, 0.0
    %vm162 = vcmask 15360
    %v164 = vsel %vm162, %v30, 0
    %v167 = vsel %vm162, %v31, 0
    %vm169 = vcmask 1041408
    %v171 = vsel %vm169, %v161, 0
    %173 = vmatprep.subr.mxu0 0.0
    %174 = vmatpush1.msra.mxu0 0.0
    %175 = vmatprep.subr.mxu0 0.0
    %176 = vmatpush1.msra.mxu0 0.0
    %177 = vmatprep.subr.mxu0 0.0
    %178 = vmatpush1.msra.mxu0 0.0
    %179 = vmatprep.subr.mxu0 0.0
    %180 = vmatpush1.msra.mxu0 0.0
    %181 = vmatprep.subr.mxu0 0.0
    %182 = vmatpush1.msra.mxu0 0.0
    %183 = vmatprep.subr.mxu0 0.0
    %184 = vmatpush1.msra.mxu0 0.0
    %185 = vmatprep.subr.mxu0 0.0
    %186 = vmatpush1.msra.mxu0 0.0
    %187 = vmatprep.subr.mxu0 0.0
    %188 = vmatpush1.msra.mxu0 0.0
    %189 = vmatprep.subr.mxu0 0.0
    %190 = vmatpush1.msra.mxu0 0.0
    %191 = vmatprep.subr.mxu0 0.0
    %192 = vmatpush1.msra.mxu0 0.0
    %193 = vmatprep.subr.mxu0 0.0
    %194 = vmatpush1.msra.mxu0 0.0
    %195 = vmatprep.subr.mxu0 0.0
    %196 = vmatpush1.msra.mxu0 0.0
    %197 = vmatprep.subr.mxu0 0.0
    %198 = vmatpush1.msra.mxu0 0.0
    %199 = vmatprep.subr.mxu0 0.0
    %200 = vmatpush1.msra.mxu0 0.0
    %201 = vmatprep.subr.mxu0 0.0
    %202 = vmatpush1.msra.mxu0 0.0
    %203 = vmatprep.subr.mxu0 0.0
    %204 = vmatpush1.msra.mxu0 %v171
    %205 = vmatprep.subr.mxu0 0.0
    %206 = vmatpush2.msra.mxu0 0.0
    %207 = vmatprep.subr.mxu0 0.0
    %208 = vmatpush2.msra.mxu0 0.0
    %209 = vmatprep.subr.mxu0 0.0
    %210 = vmatpush2.msra.mxu0 0.0
    %211 = vmatprep.subr.mxu0 0.0
    %212 = vmatpush2.msra.mxu0 0.0
    %213 = vmatprep.subr.mxu0 0.0
    %214 = vmatpush2.msra.mxu0 0.0
    %215 = vmatprep.subr.mxu0 0.0
    %216 = vmatpush2.msra.mxu0 0.0
    %217 = vmatprep.subr.mxu0 0.0
    %218 = vmatpush2.msra.mxu0 0.0
    %219 = vmatprep.subr.mxu0 0.0
    %220 = vmatpush2.msra.mxu0 0.0
    %221 = vmatprep.subr.mxu0 0.0
    %222 = vmatpush2.msra.mxu0 0.0
    %223 = vmatprep.subr.mxu0 0.0
    %224 = vmatpush2.msra.mxu0 0.0
    %225 = vmatprep.subr.mxu0 0.0
    %226 = vmatpush2.msra.mxu0 0.0
    %227 = vmatprep.subr.mxu0 0.0
    %228 = vmatpush2.msra.mxu0 0.0
    %229 = vmatprep.subr.mxu0 0.0
    %230 = vmatpush2.msra.mxu0 0.0
    %231 = vmatprep.subr.mxu0 0.0
    %232 = vmatpush2.msra.mxu0 0.0
    %233 = vmatprep.subr.mxu0 0.0
    %234 = vmatpush2.msra.mxu0 0.0
    %235 = vmatprep.subr.mxu0 0.0
    %236 = vmatpush2.msra.mxu0 0.0
    %237 = vmatprep.mubr.f32.mxu0 0.0
    %238 = vmatmul.mubr.f32.gmra.mxu0 %v164
    %v239 = vpop.f32.mrf.mxu0
    %v240 = vadd.f32 0.0, %v239
    %v241 = vpop.f32.mrf.mxu0
    %242 = vmatprep.mubr.f32.mxu0 0.0
    %243 = vmatmul.mubr.f32.gmra.mxu0 %v167
    %v244 = vpop.f32.mrf.mxu0
    %v245 = vadd.f32 0.0, %v244
    %v246 = vpop.f32.mrf.mxu0
    %247 = vdwg.mxu0
    %250 = vrot.lane.b32.xlu0 %v240, 126
    %v251 = vpop.permute.xlu0 %250
    %252 = vrot.lane.b32.xlu0 %v245, 126
    %v253 = vpop.permute.xlu0 %252
    %v256 = vadd.f32 %v240, %v251
    %v257 = vadd.f32 %v245, %v253
    %v258 = vxor.u32 %v256, 2147483648
    %v259 = vxor.u32 %v257, 2147483648
    %v260 = vmul.f32 %v258, 1.442695
    %v261 = vpow.pop %v260
    %v262 = vmul.f32 %v259, 1.442695
    %v263 = vpow.pop %v262
    %v264 = vadd.f32 %v261, 1.0
    %v265 = vadd.f32 %v263, 1.0
    %v266 = vrcp.pop %v264
    %v267 = vmul.f32 1.0, %v266
    %v268 = vrcp.pop %v265
    %v269 = vmul.f32 1.0, %v268
    %271 = vset.pattern.permute.xlu0 0
    %272 = vperm.xlu0 %271, %v267
    %v273 = vpop.permute.xlu0 %272
    %276 = vset.pattern.permute.xlu0 0
    %277 = vperm.xlu0 %276, %v269
    %v278 = vpop.permute.xlu0 %277
    %v280 = vmul.f32 %v32, %v273
    %v281 = vmul.f32 %v33, %v273
    %v282 = vmul.f32 %v34, %v278
    %v283 = vmul.f32 %v35, %v278
    %284 = vst [vmem:[#allocation5] sm:$0xff] %v280
    %285 = vst [vmem:[#allocation5 + $0x8] sm:$0xff] %v281
    %286 = vst [vmem:[#allocation5 + $0x10] sm:$0xff] %v282
    %287 = vst [vmem:[#allocation5 + $0x18] sm:$0xff] %v283
    %288 = vset.pattern.permute.xlu0 1
    %289 = vperm.xlu0 %288, %v267
    %v290 = vpop.permute.xlu0 %289
    %292 = vset.pattern.permute.xlu0 1
    %293 = vperm.xlu0 %292, %v269
    %v294 = vpop.permute.xlu0 %293
    %v296 = vld [vmem:[%s52] sm:$0xff]
    %v297 = vld [vmem:[%s52 + $0x8] sm:$0xff]
    %v298 = vld [vmem:[%s52 + $0x10] sm:$0xff]
    %v299 = vld [vmem:[%s52 + $0x18] sm:$0xff]
    %v300 = vmul.f32 %v296, %v290
    %v301 = vmul.f32 %v297, %v290
    %v302 = vmul.f32 %v298, %v294
    %v303 = vmul.f32 %v299, %v294
    %s304 = scalar_lea.vmem [#allocation5], 32
    %305 = vst [vmem:[%s304] sm:$0xff] %v300
    %306 = vst [vmem:[%s304 + $0x8] sm:$0xff] %v301
    %307 = vst [vmem:[%s304 + $0x10] sm:$0xff] %v302
    %308 = vst [vmem:[%s304 + $0x18] sm:$0xff] %v303
    // Predicated region
    $region18: #{tpu_custom_call.1} parent=1 // pred_check
      _
    $region19: #{tpu_custom_call.1} parent=1 // pred_check_branch
      %310 = sbr.rel (0) target = $region21
    $region20: #{tpu_custom_call.1} parent=1 // pred_region
      %s312 = ssub.s32 1024, 1024
      %313 = vsyncadd [#allocation4], %s312
      %s314 = sshll.u32 [#allocation5], 4
      %s315 = int_to_ptr.vmem [resolvable:$true] %s314
      %320 = dma.vmem_to_hbm [thread:$0]  %s315, 1024, %s3, [#allocation4], 256, 256, 16
    $region21: #{tpu_custom_call.1} parent=1 // pred_fallthru
      _
    // Predicated region
    $region22: #{tpu_custom_call.1} parent=1 // pred_check
      _
    $region23: #{tpu_custom_call.1} parent=1 // pred_check_branch
      %322 = sbr.rel (0) target = $region25
    $region24: #{tpu_custom_call.1} parent=1 // pred_region
      %323 = dma.done [#allocation4], 1024
    $region25: #{tpu_custom_call.1} parent=1 // pred_fallthru
      _
    %324 = vsyncpa [#allocation3], 1
    %325 = vsyncpa [#allocation4], 1

</llo_original>
